<compile_context>
chip_gen: v7x
topology: tpu7x:2x2x1
jax: 0.10.0
libtpu: 0.0.40
codegen_flags: <defaults>
</compile_context>

<pallas_src>
import math

import jax
import jax.numpy as jnp
from jax.experimental import pallas as pl
from jax.experimental.pallas import tpu as pltpu

LANE = 128                       # vreg lane width
TARGET_BLOCK_BYTES = 2 << 20     # ~2 MiB per operand per grid step


# --------------------------------------------------------------------------
# kernels
# --------------------------------------------------------------------------
def _make_list_kernel(n, weighted):
    """Kernel over one (tr, cols) block of each of n separate inputs."""

    def kernel(w_ref, *refs):            # w_ref: SMEM scalar-prefetched weights
        x_refs, o_ref = refs[:n], refs[n]
        acc = x_refs[0][...].astype(jnp.float32)
        for i in range(1, n):            # n is static & small -> unrolled
            xi = x_refs[i][...].astype(jnp.float32)
            acc = acc + (xi * w_ref[i - 1] if weighted else xi)
        o_ref[...] = acc.astype(o_ref.dtype)

    return kernel


def _make_stacked_kernel(n, weighted):
    """Kernel over one (n, tr, cols) block of a single stacked input."""

    def kernel(w_ref, x_ref, o_ref):
        acc = x_ref[0].astype(jnp.float32)
        for i in range(1, n):
            xi = x_ref[i].astype(jnp.float32)
            acc = acc + (xi * w_ref[i - 1] if weighted else xi)
        o_ref[...] = acc.astype(o_ref.dtype)

    return kernel


# --------------------------------------------------------------------------
# tiling heuristics
# --------------------------------------------------------------------------
def _tpu_backend_info():
    """(vmem_budget_bytes, vmem_capacity_bytes, num_tensorcores) best effort."""
    cap = 64 << 20                                   # conservative default (v7x)
    try:
        cap = int(pltpu.get_tpu_info().vmem_capacity_bytes)
    except Exception:
        pass
    budget = int(cap * 0.65)                         # headroom for Mosaic scratch
    # v7x: 64 MiB VMEM / 2 TensorCores per chip.  v5e/v6e: 128 MiB / 1 TC.
    num_cores = 2 if cap <= (64 << 20) else 1
    return budget, cap, num_cores


def _per_row_bytes(n_bufs, cols, itemsize):
    # double-buffered input/output blocks + a couple of f32 accumulator rows
    return 2 * n_bufs * cols * itemsize + 2 * cols * 4


def _plan_layout(shape, total):
    """Metadata-only 2-D view (rows, cols) of a contiguous array of `shape`."""
    if total % LANE == 0:
        return total // LANE, LANE                   # lane-dense fast path
    # ragged: keep the trailing dim -> no pad, no copy (partial lanes masked)
    cols = shape[-1] if len(shape) >= 2 else total
    return total // cols, cols


def _choose_block_rows(rows, cols, per_row, itemsize, budget, num_cores):
    """Largest row tile that fits the VMEM budget, shaped for the core count."""
    # sublane alignment matching the dtype's native packed layout
    row_align = 8 if itemsize >= 4 else (16 if itemsize == 2 else 32)
    rnd_up = lambda v: max(row_align, ((v + row_align - 1) // row_align) * row_align)

    tr_budget = max(row_align, (budget // per_row) // row_align * row_align)
    tr_target = max(row_align,
                    (TARGET_BLOCK_BYTES // (cols * itemsize)) // row_align * row_align)
    tr = min(tr_target, tr_budget)

    # Whole problem in one block (no per-step overhead) on single-TC chips,
    # and for small problems on multi-TC chips.
    if rows <= tr and (num_cores <= 1 or rows < 4 * row_align * num_cores):
        return rows                                  # full-dim block: always legal

    if num_cores > 1:
        # v7x: the 'parallel' row axis is sharded across TensorCores.  Aim for
        # a step count that is a multiple of num_cores with >= 2 steps/core.
        steps = max(2 * num_cores, pl.cdiv(rows, tr))
        steps = pl.cdiv(steps, num_cores) * num_cores
        tr = min(tr, rnd_up(pl.cdiv(rows, steps)))

    return tr if tr < rows else rows


def _vmem_limit(per_row, tr, cap):
    needed = per_row * tr + (2 << 20)
    return int(min(max(needed, 32 << 20), cap * 3 // 4))


# --------------------------------------------------------------------------
# wrappers
# --------------------------------------------------------------------------
def pallas_weighted_sum(xs, weights, weighted):
    """xs: list of n same-shaped arrays; weights: (n-1,) f32."""
    n = len(xs)
    out_shape = xs[0].shape
    out_dtype = xs[0].dtype
    itemsize = jnp.dtype(out_dtype).itemsize
    total = math.prod(out_shape)
    budget, cap, num_cores = _tpu_backend_info()

    rows, cols = _plan_layout(out_shape, total)
    n_bufs = n + 1
    per_row = _per_row_bytes(n_bufs, cols, itemsize)

    padded = False
    if cols != LANE and per_row * 8 > budget:
        # pathological: huge non-128-divisible trailing dim -> pad to lane-dense
        padded = True
        rem = (-total) % LANE
        xs = [jnp.pad(x.reshape(total), (0, rem)) for x in xs]
        rows, cols = (total + rem) // LANE, LANE
        per_row = _per_row_bytes(n_bufs, cols, itemsize)

    flats = [x.reshape(rows, cols) for x in xs]      # metadata-only reshape
    tr = _choose_block_rows(rows, cols, per_row, itemsize, budget, num_cores)
    grid = (pl.cdiv(rows, tr),)

    out = pl.pallas_call(
        _make_list_kernel(n, weighted),
        out_shape=jax.ShapeDtypeStruct((rows, cols), out_dtype),
        grid_spec=pltpu.PrefetchScalarGridSpec(
            num_scalar_prefetch=1,                   # weights -> SMEM
            grid=grid,
            in_specs=[pl.BlockSpec((tr, cols), lambda r, w: (r, 0))
                      for _ in range(n)],
            out_specs=pl.BlockSpec((tr, cols), lambda r, w: (r, 0)),
        ),
        compiler_params=pltpu.CompilerParams(
            dimension_semantics=("parallel",),
            vmem_limit_bytes=_vmem_limit(per_row, tr, cap)),
    )(weights, *flats)

    if padded:
        out = out.reshape(-1)[:total]
    return out.reshape(out_shape)


def pallas_weighted_sum_stacked(x, weights, weighted):
    """x: stacked (n, ...) array kept as ONE operand (no per-map slice copies)."""
    n = x.shape[0]
    out_shape = x.shape[1:]
    out_dtype = x.dtype
    itemsize = jnp.dtype(out_dtype).itemsize
    total = math.prod(out_shape)
    budget, cap, num_cores = _tpu_backend_info()

    rows, cols = _plan_layout(out_shape, total)
    n_bufs = n + 1
    per_row = _per_row_bytes(n_bufs, cols, itemsize)

    padded = False
    if cols != LANE and per_row * 8 > budget:
        padded = True
        rem = (-total) % LANE
        x = jnp.pad(x.reshape(n, total), ((0, 0), (0, rem)))
        rows, cols = (total + rem) // LANE, LANE
        per_row = _per_row_bytes(n_bufs, cols, itemsize)

    x3 = x.reshape(n, rows, cols)                    # metadata-only reshape
    tr = _choose_block_rows(rows, cols, per_row, itemsize, budget, num_cores)
    grid = (pl.cdiv(rows, tr),)

    out = pl.pallas_call(
        _make_stacked_kernel(n, weighted),
        out_shape=jax.ShapeDtypeStruct((rows, cols), out_dtype),
        grid_spec=pltpu.PrefetchScalarGridSpec(
            num_scalar_prefetch=1,
            grid=grid,
            in_specs=[pl.BlockSpec((n, tr, cols), lambda r, w: (0, r, 0))],
            out_specs=pl.BlockSpec((tr, cols), lambda r, w: (r, 0)),
        ),
        compiler_params=pltpu.CompilerParams(
            dimension_semantics=("parallel",),
            vmem_limit_bytes=_vmem_limit(per_row, tr, cap)),
    )(weights, x3)

    if padded:
        out = out.reshape(-1)[:total]
    return out.reshape(out_shape)


class SumPallas:
    """JAX/Pallas equivalent of the PyTorch `Sum` module (forward pass)."""

    def __init__(self, n, weight=False):
        self.n = n
        self.weight = weight
        if weight:
            # same deterministic init as the PyTorch __init__:
            #   self.w = -torch.arange(1., n) / 2
            self.w = (-jnp.arange(1.0, n) / 2.0).astype(jnp.float32)

    def __call__(self, x):
        if self.n == 1:
            return x[0]
        if self.weight:
            w_eff = (jax.nn.sigmoid(self.w) * 2.0).astype(jnp.float32)
        else:
            w_eff = jnp.ones((self.n - 1,), jnp.float32)   # kernel ignores it
        if isinstance(x, (list, tuple)):
            return pallas_weighted_sum(list(x), w_eff, self.weight)
        # stacked (n, ...) array accepted too -- processed as a single operand
        return pallas_weighted_sum_stacked(x, w_eff, self.weight)


# --------------------------------------------------------------------------
# reference + tests
# --------------------------------------------------------------------------
def _reference(xs, n, weight, w_param):
    y = xs[0]
    if weight:
        w = jax.nn.sigmoid(w_param) * 2.0
        for i in range(n - 1):
            y = y + xs[i + 1] * w[i]
    else:
        for i in range(n - 1):
            y = y + xs[i + 1]
    return y


if __name__ == "__main__":
    key = jax.random.PRNGKey(0)
    n = 3
    B, C, H, W = 2, 4, 16, 16
    keys = jax.random.split(key, n)
    xs = [jax.random.normal(k, (B, C, H, W), dtype=jnp.float32) for k in keys]

    # weighted variant (list inputs)
    mod_w = SumPallas(n, weight=True)
    y_w = jax.block_until_ready(mod_w(xs))
    ref_w = _reference(xs, n, True, mod_w.w)
    assert y_w.shape == (B, C, H, W)
    assert y_w.dtype == xs[0].dtype
    assert jnp.allclose(y_w, ref_w, atol=1e-5, rtol=1e-5)

    # unweighted variant, stacked input (single-operand path)
    x_stacked = jnp.stack(xs, axis=0)
    mod_u = SumPallas(n, weight=False)
    y_u = jax.block_until_ready(mod_u(x_stacked))
    ref_u = _reference(xs, n, False, None)
    assert jnp.allclose(y_u, ref_u, atol=1e-5, rtol=1e-5)

    # ragged case: element count not a multiple of 128 -> no pad / no copy path
    xs_r = [jax.random.normal(k, (2, 3, 5, 7), dtype=jnp.float32) for k in keys]
    y_r = jax.block_until_ready(mod_w(xs_r))
    ref_r = _reference(xs_r, n, True, mod_w.w)
    assert jnp.allclose(y_r, ref_r, atol=1e-5, rtol=1e-5)

    # bf16 inputs: read bf16, accumulate f32, output bf16 (dtype preserved)
    xs_b = [x.astype(jnp.bfloat16) for x in xs]
    y_b = jax.block_until_ready(mod_w(xs_b))
    ref_b = _reference(xs_b, n, True, mod_w.w)
    assert y_b.dtype == jnp.bfloat16
    assert jnp.allclose(y_b.astype(jnp.float32), ref_b.astype(jnp.float32),
                        atol=2e-2, rtol=2e-2)

    # medium size to exercise the multi-step (tiled) grid path
    xs_m = [jax.random.normal(k, (4, 16, 128, 128), dtype=jnp.float32)
            for k in keys]
    y_m = jax.block_until_ready(mod_w(xs_m))
    ref_m = _reference(xs_m, n, True, mod_w.w)
    assert jnp.allclose(y_m, ref_m, atol=1e-5, rtol=1e-5)

    print("KERNEL_OK")
</pallas_src>

<mosaic_0001>
module attributes {stable_mosaic.version = 11 : i64} {
  func.func @kernel(%arg0: i32, %arg1: memref<2xf32, #tpu.memory_space<smem>>, %arg2: memref<16x128xf32, #tpu.memory_space<vmem>>, %arg3: memref<16x128xf32, #tpu.memory_space<vmem>>, %arg4: memref<16x128xf32, #tpu.memory_space<vmem>>, %arg5: memref<16x128xf32, #tpu.memory_space<vmem>>) attributes {dimension_semantics = [#tpu.dimension_semantics<parallel>], iteration_bounds = array<i64: 1>, scalar_prefetch = 1 : i64, scratch_operands = 0 : i64, tpu.core_type = #tpu.core_type<tc>, window_params = [{transform_indices = @transform_0, window_bounds = array<i64: 16, 128>}, {transform_indices = @transform_1, window_bounds = array<i64: 16, 128>}, {transform_indices = @transform_2, window_bounds = array<i64: 16, 128>}, {transform_indices = @transform_3, window_bounds = array<i64: 16, 128>}]} {
    %c0 = arith.constant 0 : index
    %c0_0 = arith.constant 0 : index
    %0 = vector.load %arg2[%c0, %c0_0] : memref<16x128xf32, #tpu.memory_space<vmem>>, vector<16x128xf32>
    %c0_1 = arith.constant 0 : index
    %c0_2 = arith.constant 0 : index
    %1 = vector.load %arg3[%c0_1, %c0_2] : memref<16x128xf32, #tpu.memory_space<vmem>>, vector<16x128xf32>
    %c0_3 = arith.constant 0 : index
    %2 = memref.load %arg1[%c0_3] : memref<2xf32, #tpu.memory_space<smem>>
    %3 = vector.broadcast %2 : f32 to vector<16x128xf32>
    %4 = arith.mulf %1, %3 : vector<16x128xf32>
    %5 = arith.addf %0, %4 : vector<16x128xf32>
    %c0_4 = arith.constant 0 : index
    %c0_5 = arith.constant 0 : index
    %6 = vector.load %arg4[%c0_4, %c0_5] : memref<16x128xf32, #tpu.memory_space<vmem>>, vector<16x128xf32>
    %c1 = arith.constant 1 : index
    %7 = memref.load %arg1[%c1] : memref<2xf32, #tpu.memory_space<smem>>
    %8 = vector.broadcast %7 : f32 to vector<16x128xf32>
    %9 = arith.mulf %6, %8 : vector<16x128xf32>
    %10 = arith.addf %5, %9 : vector<16x128xf32>
    %c0_6 = arith.constant 0 : index
    %c0_7 = arith.constant 0 : index
    %11 = vector.load %arg5[%c0_6, %c0_7] : memref<16x128xf32, #tpu.memory_space<vmem>>, vector<16x128xf32>
    tpu.vector_store %arg5[%c0_6, %c0_7], %10 {strides = array<i32>} : memref<16x128xf32, #tpu.memory_space<vmem>>, vector<16x128xf32>,
    return
  }
  func.func @transform_0(%arg0: i32, %arg1: memref<2xf32, #tpu.memory_space<smem>>) -> (i32, i32) {
    %c0_i32 = arith.constant 0 : i32
    %c0_i32_0 = arith.constant 0 : i32
    return %arg0, %c0_i32 : i32, i32
  }
  func.func @transform_1(%arg0: i32, %arg1: memref<2xf32, #tpu.memory_space<smem>>) -> (i32, i32) {
    %c0_i32 = arith.constant 0 : i32
    %c0_i32_0 = arith.constant 0 : i32
    return %arg0, %c0_i32 : i32, i32
  }
  func.func @transform_2(%arg0: i32, %arg1: memref<2xf32, #tpu.memory_space<smem>>) -> (i32, i32) {
    %c0_i32 = arith.constant 0 : i32
    %c0_i32_0 = arith.constant 0 : i32
    return %arg0, %c0_i32 : i32, i32
  }
  func.func @transform_3(%arg0: i32, %arg1: memref<2xf32, #tpu.memory_space<smem>>) -> (i32, i32) {
    %c0_i32 = arith.constant 0 : i32
    %c0_i32_0 = arith.constant 0 : i32
    return %arg0, %c0_i32 : i32, i32
  }
}

</mosaic_0001>

<llo_original>
// kernel: tpu_custom_call.1
$region0: #{tpu_custom_call.1}
  #allocation0 [shape = 'u32[]', space=smem, size = 0x4, offset = 0x4, fixed_abs, tag = 'smem constant byte address 0x4 - core index']
  #allocation1 [shape = 'u32[144,128]{1,0:T(1,128)}', space=vmem, size = 0x12000, scoped, tag = 'internal scratch']
  #allocation2 [shape = 's32[1]{0}', space=sflag, size = 0x4, scoped, tag = 'scoped memory for tpu_custom_call.1']
  #allocation3 [shape = 'u8[512]{0}', space=smem, size = 0x200, scoped, tag = 'prefetched SMEM operand 0']
  %s0 = inlined_call_operand.hbm [shape: f32[2], index: 0, kind: input, shape index: {}]
  %s1 = inlined_call_operand.hbm [shape: f32[16,128], index: 1, kind: input, shape index: {}]
  %s2 = inlined_call_operand.hbm [shape: f32[16,128], index: 2, kind: input, shape index: {}]
  %s3 = inlined_call_operand.hbm [shape: f32[16,128], index: 3, kind: input, shape index: {}]
  %s4 = inlined_call_operand.hbm [shape: f32[16,128], index: 4, kind: output, shape index: {}]
  %s5 = sld [smem:[#allocation0]]
  $region34: #{tpu_custom_call.1} parent=0
    _
  %s7 = ssub.s32 1, %s5
  %s8 = scalar_select 0, %s7, %s5
  %10 = dma.hbm_to_smem %s0, 16, [#allocation3], [#allocation2]
  %11 = dma.done [#allocation2], 16
  %12 = sfence
  $region1: #{tpu_custom_call.1} parent=0
    #allocation4 [shape = 'u8[8192]{0}', space=vmem, size = 0x2000, scoped, tag = 'input window, operand 1, single buffered']
    #allocation5 [shape = 's32[1]{0}', space=sflag, size = 0x4, scoped, tag = 'scoped memory for tpu_custom_call.1']
    #allocation6 [shape = 's32[1]{0}', space=sflag, size = 0x4, scoped, tag = 'scoped memory for tpu_custom_call.1']
    #allocation7 [shape = 'u8[8192]{0}', space=vmem, size = 0x2000, scoped, tag = 'input window, operand 2, single buffered']
    #allocation8 [shape = 's32[1]{0}', space=sflag, size = 0x4, scoped, tag = 'scoped memory for tpu_custom_call.1']
    #allocation9 [shape = 'u8[8192]{0}', space=vmem, size = 0x2000, scoped, tag = 'input window, operand 3, single buffered']
    #allocation10 [shape = 'u8[8192]{0}', space=vmem, size = 0x2000, scoped, tag = 'output window, operand 0, single buffered']
    %13 = vsyncpa [#allocation5], 0
    %14 = vsyncpa [#allocation8], 0
    %15 = vsyncpa [#allocation6], 0
    // Predicated region
    $region2: #{tpu_custom_call.1} parent=1 // pred_check
      _
    $region3: #{tpu_custom_call.1} parent=1 // pred_check_branch
      %17 = sbr.rel (0) target = $region5
    $region4: #{tpu_custom_call.1} parent=1 // pred_region
      %s19 = ssub.s32 256, 256
      %20 = vsyncadd [#allocation5], %s19
      %s21 = sshll.u32 [#allocation4], 4
      %s22 = int_to_ptr.vmem [resolvable:$true] %s21
      %27 = dma.hbm_to_vmem [thread:$0]  %s1, 256, %s22, [#allocation5], 128, 128, 8
    $region5: #{tpu_custom_call.1} parent=1 // pred_fallthru
      _
    // Predicated region
    $region6: #{tpu_custom_call.1} parent=1 // pred_check
      _
    $region7: #{tpu_custom_call.1} parent=1 // pred_check_branch
      %29 = sbr.rel (0) target = $region9
    $region8: #{tpu_custom_call.1} parent=1 // pred_region
      %s31 = ssub.s32 256, 256
      %32 = vsyncadd [#allocation8], %s31
      %s33 = sshll.u32 [#allocation7], 4
      %s34 = int_to_ptr.vmem [resolvable:$true] %s33
      %39 = dma.hbm_to_vmem [thread:$0]  %s2, 256, %s34, [#allocation8], 128, 128, 8
    $region9: #{tpu_custom_call.1} parent=1 // pred_fallthru
      _
    // Predicated region
    $region10: #{tpu_custom_call.1} parent=1 // pred_check
      _
    $region11: #{tpu_custom_call.1} parent=1 // pred_check_branch
      %41 = sbr.rel (0) target = $region13
    $region12: #{tpu_custom_call.1} parent=1 // pred_region
      %s43 = ssub.s32 256, 256
      %44 = vsyncadd [#allocation8], %s43
      %s45 = sshll.u32 [#allocation9], 4
      %s46 = int_to_ptr.vmem [resolvable:$true] %s45
      %51 = dma.hbm_to_vmem [thread:$0]  %s3, 256, %s46, [#allocation8], 128, 128, 8
    $region13: #{tpu_custom_call.1} parent=1 // pred_fallthru
      _
    // Predicated region
    $region14: #{tpu_custom_call.1} parent=1 // pred_check
      _
    $region15: #{tpu_custom_call.1} parent=1 // pred_check_branch
      %53 = sbr.rel (0) target = $region17
    $region16: #{tpu_custom_call.1} parent=1 // pred_region
      %54 = dma.done [#allocation5], 256
    $region17: #{tpu_custom_call.1} parent=1 // pred_fallthru
      _
    // Predicated region
    $region18: #{tpu_custom_call.1} parent=1 // pred_check
      _
    $region19: #{tpu_custom_call.1} parent=1 // pred_check_branch
      %56 = sbr.rel (0) target = $region21
    $region20: #{tpu_custom_call.1} parent=1 // pred_region
      %57 = dma.done [#allocation8], 256
    $region21: #{tpu_custom_call.1} parent=1 // pred_fallthru
      _
    // Predicated region
    $region22: #{tpu_custom_call.1} parent=1 // pred_check
      _
    $region23: #{tpu_custom_call.1} parent=1 // pred_check_branch
      %59 = sbr.rel (0) target = $region25
    $region24: #{tpu_custom_call.1} parent=1 // pred_region
      %60 = dma.done [#allocation8], 256
    $region25: #{tpu_custom_call.1} parent=1 // pred_fallthru
      _
    %v61 = vld [vmem:[#allocation4] sm:$0xff]
    %v62 = vld [vmem:[#allocation4 + $0x8] sm:$0xff]
    %v63 = vld [vmem:[#allocation7] sm:$0xff]
    %v64 = vld [vmem:[#allocation7 + $0x8] sm:$0xff]
    %s65 = sld [smem:[#allocation3]]
    %v66 = vstv %s65
    %v67 = vmul.f32 %v63, %v66
    %v68 = vmul.f32 %v64, %v66
    %v69 = vadd.f32 %v61, %v67
    %v70 = vadd.f32 %v62, %v68
    %v71 = vld [vmem:[#allocation9] sm:$0xff]
    %v72 = vld [vmem:[#allocation9 + $0x8] sm:$0xff]
    %s73 = sld [smem:[#allocation3 + $0x1]]
    %v74 = vstv %s73
    %v75 = vmul.f32 %v71, %v74
    %v76 = vmul.f32 %v72, %v74
    %v77 = vadd.f32 %v69, %v75
    %v78 = vadd.f32 %v70, %v76
    %79 = vst [vmem:[#allocation10] sm:$0xff] %v77
    %80 = vst [vmem:[#allocation10 + $0x8] sm:$0xff] %v78
    // Predicated region
    $region26: #{tpu_custom_call.1} parent=1 // pred_check
      _
    $region27: #{tpu_custom_call.1} parent=1 // pred_check_branch
      %82 = sbr.rel (0) target = $region29
    $region28: #{tpu_custom_call.1} parent=1 // pred_region
      %s84 = ssub.s32 256, 256
      %85 = vsyncadd [#allocation6], %s84
      %s86 = sshll.u32 [#allocation10], 4
      %s87 = int_to_ptr.vmem [resolvable:$true] %s86
      %92 = dma.vmem_to_hbm [thread:$0]  %s87, 256, %s4, [#allocation6], 128, 128, 8
    $region29: #{tpu_custom_call.1} parent=1 // pred_fallthru
      _
    // Predicated region
    $region30: #{tpu_custom_call.1} parent=1 // pred_check
      _
    $region31: #{tpu_custom_call.1} parent=1 // pred_check_branch
      %94 = sbr.rel (0) target = $region33
    $region32: #{tpu_custom_call.1} parent=1 // pred_region
      %95 = dma.done [#allocation6], 256
    $region33: #{tpu_custom_call.1} parent=1 // pred_fallthru
      _
    %96 = vsyncpa [#allocation5], 1
    %97 = vsyncpa [#allocation8], 1
    %98 = vsyncpa [#allocation6], 1

</llo_original>
